<compile_context>
chip_gen: v6e
topology: v6e:2x2x1
jax: 0.10.0
libtpu: 0.0.40
codegen_flags: <defaults>
</compile_context>

<pallas_src>
import functools

import jax
import jax.numpy as jnp
from jax.experimental import pallas as pl
from jax.experimental.pallas import tpu as pltpu

_LANE = 128
_SUBLANE = 8


def _round_up(n: int, m: int) -> int:
    return ((n + m - 1) // m) * m


def _auto_matmul_dtype():
    """bf16 operands on bf16-native MXUs (v6e/v7x), f32 otherwise."""
    try:
        kind = jax.devices()[0].device_kind.lower()
    except Exception:
        return jnp.dtype(jnp.float32)
    if any(tag in kind for tag in ("v6", "v7", "7x")):
        return jnp.dtype(jnp.bfloat16)
    return jnp.dtype(jnp.float32)


def _resolve_matmul_dtype(d):
    if d is None or (isinstance(d, str) and d == "auto"):
        return _auto_matmul_dtype()
    return jnp.dtype(d)


def _default_weight_budget_bytes():
    """Weight-resident budget before switching to the H-tiled kernel."""
    try:
        kind = jax.devices()[0].device_kind.lower()
    except Exception:
        return 24 << 20
    if "v7" in kind or "7x" in kind:
        return 20 << 20      # v7x: 64 MiB VMEM per TensorCore
    return 48 << 20          # v5e/v6e: 128 MiB physical VMEM


def _vmem_limit_bytes(needed: int) -> int:
    limit = int(1.25 * needed) + (2 << 20)
    return max(32 << 20, min(limit, 128 << 20))


def _pad2d(a, rows, cols, dtype):
    """Cast + zero-pad to (rows, cols); no copy when already aligned."""
    if a.dtype != dtype:
        a = a.astype(dtype)
    r, c = a.shape
    if (r, c) == (rows, cols):
        return a
    return jnp.pad(a, ((0, rows - r), (0, cols - c)))


def _choose_batch_tile(B: int, block_b: int):
    TB = max(_SUBLANE, _round_up(min(block_b, B), _SUBLANE))
    Bp = _round_up(B, TB)
    # Guarantee >=2 grid steps when there is enough batch, so the "parallel"
    # batch axis can be sharded across v7x's two TensorCores.
    if Bp // TB < 2 and Bp >= 2 * _SUBLANE:
        TB = max(_SUBLANE, _round_up((Bp + 1) // 2, _SUBLANE))
        Bp = _round_up(B, TB)
    return TB, Bp


def _choose_h_tile(Hp: int, h_tile):
    if h_tile is not None:
        assert Hp % h_tile == 0 and h_tile % _LANE == 0
        return h_tile
    for cand in (1024, 512, 256, 128):
        if Hp % cand == 0:
            return cand
    return _LANE


# ---------------------------------------------------------------------------
# Kernels
# ---------------------------------------------------------------------------
def _mlp_kernel(x_ref, w1_ref, b1_ref, w2_ref, b2_ref, o_ref):
    """Weight-resident path: whole hidden dim in one shot."""
    h = jnp.dot(x_ref[...], w1_ref[...], preferred_element_type=jnp.float32)
    h = jnp.tanh(h + b1_ref[...])                       # VPU add + EUP tanh, f32
    y = jnp.dot(h.astype(w2_ref.dtype), w2_ref[...],
                preferred_element_type=jnp.float32)
    o_ref[...] = (y + b2_ref[...]).astype(o_ref.dtype)


def _mlp_kernel_htiled(x_ref, w1_ref, b1_ref, w2_ref, b2_ref, o_ref, acc_ref):
    """H-tiled path: hidden dim is a reduction grid axis, f32 accumulator."""
    k = pl.program_id(1)

    @pl.when(k == 0)
    def _():
        acc_ref[...] = jnp.zeros_like(acc_ref)

    h = jnp.dot(x_ref[...], w1_ref[...], preferred_element_type=jnp.float32)
    h = jnp.tanh(h + b1_ref[...])
    acc_ref[...] += jnp.dot(h.astype(w2_ref.dtype), w2_ref[...],
                            preferred_element_type=jnp.float32)

    @pl.when(k == pl.num_programs(1) - 1)
    def _():
        o_ref[...] = (acc_ref[...] + b2_ref[...]).astype(o_ref.dtype)


# ---------------------------------------------------------------------------
# Wrappers
# ---------------------------------------------------------------------------
def prepare_params(w1, b1, w2, b2, matmul_dtype="auto"):
    """Pad/cast the weights+biases ONCE (they are constant across calls).

    w1: (D_in, H) == fc1.weight.T, b1: (H,), w2: (H, D_out) == fc2.weight.T,
    b2: (D_out,).  Returns padded (w1, b1, w2, b2).
    """
    mat_dtype = _resolve_matmul_dtype(matmul_dtype)
    D_in, H = w1.shape
    D_out = w2.shape[1]
    Dp, Hp, Op = (_round_up(D_in, _LANE), _round_up(H, _LANE),
                  _round_up(D_out, _LANE))
    w1_p = _pad2d(w1, Dp, Hp, mat_dtype)
    w2_p = _pad2d(w2, Hp, Op, mat_dtype)
    # biases stay f32 (bias-add / tanh happen in f32 regardless of mat dtype)
    b1_p = _pad2d(b1.reshape(1, -1), 1, Hp, jnp.float32)
    b2_p = _pad2d(b2.reshape(1, -1), 1, Op, jnp.float32)
    return (w1_p, b1_p, w2_p, b2_p)


@functools.partial(
    jax.jit,
    static_argnames=("out_dim", "block_b", "weight_budget_bytes", "h_tile"))
def mlp_forward(x, params, *, out_dim, block_b=256,
                weight_budget_bytes=None, h_tile=None):
    """Forward pass using pre-padded params (see prepare_params)."""
    w1_p, b1_p, w2_p, b2_p = params
    B, D_in = x.shape
    Dp, Hp = w1_p.shape
    Op = w2_p.shape[1]
    mat_dtype = w1_p.dtype
    out_dtype = x.dtype
    itemsize = jnp.dtype(mat_dtype).itemsize
    out_itemsize = jnp.dtype(out_dtype).itemsize

    if weight_budget_bytes is None:
        weight_budget_bytes = _default_weight_budget_bytes()

    TB, Bp = _choose_batch_tile(B, block_b)

    # Per-call padding for x only; skipped entirely when already aligned.
    # (Zero padding is exact: padded K-columns contribute 0, padded hidden
    # units are tanh(0)=0 hitting zero rows of w2, padded outputs are sliced.)
    x_p = x.astype(mat_dtype) if x.dtype != mat_dtype else x
    if (Bp, Dp) != (B, D_in):
        x_p = jnp.pad(x_p, ((0, Bp - B), (0, Dp - D_in)))
    # NOTE: for small unaligned D_in one could pass the true D_in as a
    # full-extent K block instead of padding to Dp to save HBM traffic.

    cost = pl.CostEstimate(
        flops=2 * Bp * (Dp * Hp + Hp * Op),
        transcendentals=Bp * Hp,
        bytes_accessed=(Bp * Dp + Dp * Hp + Hp * Op) * itemsize
        + (Hp + Op) * 4 + Bp * Op * out_itemsize,
    )

    weight_bytes = (Dp * Hp + Hp * Op) * itemsize + (Hp + Op) * 4

    if weight_bytes <= weight_budget_bytes:
        # ------- weight-resident path (weights single-buffered in VMEM) -----
        stream_bytes = 2 * TB * (Dp * itemsize + Op * out_itemsize)
        inter_bytes = TB * Hp * (4 + itemsize) + TB * Op * 4
        vmem_limit = _vmem_limit_bytes(weight_bytes + stream_bytes + inter_bytes)

        out_p = pl.pallas_call(
            _mlp_kernel,
            out_shape=jax.ShapeDtypeStruct((Bp, Op), out_dtype),
            grid_spec=pl.GridSpec(
                grid=(Bp // TB,),
                in_specs=[
                    # x: streamed per batch tile (default double-buffered)
                    pl.BlockSpec((TB, Dp), lambda i: (i, 0)),
                    # grid-invariant operands: single-buffered, VMEM-resident
                    pl.BlockSpec((Dp, Hp), lambda i: (0, 0),
                                 pipeline_mode=pl.Buffered(1)),
                    pl.BlockSpec((1, Hp), lambda i: (0, 0),
                                 pipeline_mode=pl.Buffered(1)),
                    pl.BlockSpec((Hp, Op), lambda i: (0, 0),
                                 pipeline_mode=pl.Buffered(1)),
                    pl.BlockSpec((1, Op), lambda i: (0, 0),
                                 pipeline_mode=pl.Buffered(1)),
                ],
                out_specs=pl.BlockSpec((TB, Op), lambda i: (i, 0)),
            ),
            compiler_params=pltpu.CompilerParams(
                dimension_semantics=("parallel",),
                vmem_limit_bytes=vmem_limit,
            ),
            cost_estimate=cost,
        )(x_p, w1_p, b1_p, w2_p, b2_p)
    else:
        # ------- H-tiled path: hidden dim as reduction axis + f32 acc -------
        TH = _choose_h_tile(Hp, h_tile)
        tile_bytes = 2 * (Dp * TH + TH * Op) * itemsize + 4 * TH * 4 + Op * 4
        stream_bytes = 2 * TB * (Dp * itemsize + Op * out_itemsize)
        inter_bytes = TB * TH * (4 + itemsize) + 2 * TB * Op * 4
        vmem_limit = _vmem_limit_bytes(tile_bytes + stream_bytes + inter_bytes)

        out_p = pl.pallas_call(
            _mlp_kernel_htiled,
            out_shape=jax.ShapeDtypeStruct((Bp, Op), out_dtype),
            grid_spec=pltpu.PrefetchScalarGridSpec(
                num_scalar_prefetch=0,
                grid=(Bp // TB, Hp // TH),
                in_specs=[
                    pl.BlockSpec((TB, Dp), lambda i, k: (i, 0)),   # x (per batch)
                    pl.BlockSpec((Dp, TH), lambda i, k: (0, k)),   # w1 H-slice
                    pl.BlockSpec((1, TH), lambda i, k: (0, k)),    # b1 H-slice
                    pl.BlockSpec((TH, Op), lambda i, k: (k, 0)),   # w2 H-slice
                    pl.BlockSpec((1, Op), lambda i, k: (0, 0),
                                 pipeline_mode=pl.Buffered(1)),    # b2 resident
                ],
                out_specs=pl.BlockSpec((TB, Op), lambda i, k: (i, 0)),
                scratch_shapes=[pltpu.VMEM((TB, Op), jnp.float32)],
            ),
            compiler_params=pltpu.CompilerParams(
                dimension_semantics=("parallel", "arbitrary"),
                vmem_limit_bytes=vmem_limit,
            ),
            cost_estimate=cost,
        )(x_p, w1_p, b1_p, w2_p, b2_p)

    return out_p[:B, :out_dim]


def mlp_tanh_1h(x, w1, b1, w2, b2, *, block_b=256, matmul_dtype="auto",
                weight_budget_bytes=None, h_tile=None,
                allow_xla_fallback=False):
    """Convenience one-shot API (pads weights per call; for repeated calls
    use prepare_params() once + mlp_forward())."""
    if allow_xla_fallback and max(x.shape[0], w1.shape[0],
                                  w1.shape[1], w2.shape[1]) < _LANE:
        # Sub-vreg problem: lane padding inflates work 8-16x; XLA fusion wins.
        h = jnp.tanh(x @ w1 + b1)
        return h @ w2 + b2
    params = prepare_params(w1, b1, w2, b2, matmul_dtype=matmul_dtype)
    return mlp_forward(x, params, out_dim=w2.shape[1], block_b=block_b,
                       weight_budget_bytes=weight_budget_bytes, h_tile=h_tile)


def reference(x, w1, b1, w2, b2):
    hi = jax.lax.Precision.HIGHEST
    h = jnp.tanh(jnp.dot(x, w1, precision=hi) + b1)
    return jnp.dot(h, w2, precision=hi) + b2


def _make_mlp_inputs(key, batch, d_in, n_hid, d_out):
    kx, k1, kb1, k2, kb2 = jax.random.split(key, 5)
    x = jax.random.normal(kx, (batch, d_in), dtype=jnp.float32)
    w1 = jax.random.uniform(k1, (d_in, n_hid), jnp.float32, -1., 1.) / jnp.sqrt(d_in)
    b1 = jax.random.uniform(kb1, (n_hid,), jnp.float32, -1., 1.) / jnp.sqrt(d_in)
    w2 = jax.random.uniform(k2, (n_hid, d_out), jnp.float32, -1., 1.) / jnp.sqrt(n_hid)
    b2 = jax.random.uniform(kb2, (d_out,), jnp.float32, -1., 1.) / jnp.sqrt(n_hid)
    return x, w1, b1, w2, b2


if __name__ == "__main__":
    key = jax.random.PRNGKey(0)
    k_small, k_med = jax.random.split(key, 2)

    # --- small shapes matching MLP_Tanh_1h(input_dim=16, n_hid=32, output_dim=8)
    batch, input_dim, n_hid, output_dim = 8, 16, 32, 8
    x, w1, b1, w2, b2 = _make_mlp_inputs(k_small, batch, input_dim, n_hid, output_dim)
    ref = reference(x, w1, b1, w2, b2)

    # f32-operand path: weight-resident kernel, tight tolerance.
    out = jax.block_until_ready(
        mlp_tanh_1h(x, w1, b1, w2, b2, matmul_dtype="float32"))
    assert out.shape == (batch, output_dim)
    assert jnp.allclose(out, ref, atol=1e-5, rtol=1e-5)

    # bf16-operand path (v6e/v7x MXU-native; also the "auto" default there).
    out_bf16 = jax.block_until_ready(
        mlp_tanh_1h(x, w1, b1, w2, b2, matmul_dtype="bfloat16"))
    assert jnp.allclose(out_bf16, ref, atol=3e-2, rtol=3e-2)

    # --- medium shapes: exercise the H-tiled accumulator kernel (forced via
    #     weight_budget_bytes=0) and the >=2 batch tiles / megacore split.
    B2, D2, H2, O2 = 64, 256, 384, 192
    x2, w12, b12, w22, b22 = _make_mlp_inputs(k_med, B2, D2, H2, O2)
    ref2 = reference(x2, w12, b12, w22, b22)
    out2 = jax.block_until_ready(
        mlp_tanh_1h(x2, w12, b12, w22, b22, matmul_dtype="float32",
                    weight_budget_bytes=0))
    assert out2.shape == (B2, O2)
    assert jnp.allclose(out2, ref2, atol=1e-3, rtol=1e-3)

    print("KERNEL_OK")
</pallas_src>

<mosaic_0001>
module attributes {stable_mosaic.version = 11 : i64} {
  func.func @_mlp_kernel(%arg0: i32, %arg1: memref<8x128xf32, #tpu.memory_space<vmem>>, %arg2: memref<128x128xf32, #tpu.memory_space<vmem>>, %arg3: memref<1x128xf32, #tpu.memory_space<vmem>>, %arg4: memref<128x128xf32, #tpu.memory_space<vmem>>, %arg5: memref<1x128xf32, #tpu.memory_space<vmem>>, %arg6: memref<8x128xf32, #tpu.memory_space<vmem>>) attributes {dimension_semantics = [#tpu.dimension_semantics<parallel>], iteration_bounds = array<i64: 1>, scalar_prefetch = 0 : i64, scratch_operands = 0 : i64, tpu.core_type = #tpu.core_type<tc>, window_params = [{transform_indices = @transform_0, window_bounds = array<i64: 8, 128>}, {pipeline_mode = #tpu.pipeline_mode<synchronous>, transform_indices = @transform_1, window_bounds = array<i64: 128, 128>}, {pipeline_mode = #tpu.pipeline_mode<synchronous>, transform_indices = @transform_2, window_bounds = array<i64: 1, 128>}, {pipeline_mode = #tpu.pipeline_mode<synchronous>, transform_indices = @transform_3, window_bounds = array<i64: 128, 128>}, {pipeline_mode = #tpu.pipeline_mode<synchronous>, transform_indices = @transform_4, window_bounds = array<i64: 1, 128>}, {transform_indices = @transform_5, window_bounds = array<i64: 8, 128>}]} {
    %c0 = arith.constant 0 : index
    %c0_0 = arith.constant 0 : index
    %0 = vector.load %arg1[%c0, %c0_0] : memref<8x128xf32, #tpu.memory_space<vmem>>, vector<8x128xf32>
    %c0_1 = arith.constant 0 : index
    %c0_2 = arith.constant 0 : index
    %1 = vector.load %arg2[%c0_1, %c0_2] : memref<128x128xf32, #tpu.memory_space<vmem>>, vector<128x128xf32>
    %cst = arith.constant dense<0.000000e+00> : vector<8x128xf32>
    %2 = tpu.matmul %0, %1, %cst {dimension_numbers = #tpu.dot_dimension_numbers<[1], [0], [0], [1], [0, 0, 1, 1], [], []>} : vector<8x128xf32>, vector<128x128xf32>, vector<8x128xf32> -> vector<8x128xf32>
    %c0_3 = arith.constant 0 : index
    %c0_4 = arith.constant 0 : index
    %3 = vector.load %arg3[%c0_3, %c0_4] : memref<1x128xf32, #tpu.memory_space<vmem>>, vector<1x128xf32>
    %4 = vector.broadcast %3 : vector<1x128xf32> to vector<8x128xf32>
    %5 = arith.addf %2, %4 : vector<8x128xf32>
    %6 = math.tanh %5 : vector<8x128xf32>
    %c0_5 = arith.constant 0 : index
    %c0_6 = arith.constant 0 : index
    %7 = vector.load %arg4[%c0_5, %c0_6] : memref<128x128xf32, #tpu.memory_space<vmem>>, vector<128x128xf32>
    %cst_7 = arith.constant dense<0.000000e+00> : vector<8x128xf32>
    %8 = tpu.matmul %6, %7, %cst_7 {dimension_numbers = #tpu.dot_dimension_numbers<[1], [0], [0], [1], [0, 0, 1, 1], [], []>} : vector<8x128xf32>, vector<128x128xf32>, vector<8x128xf32> -> vector<8x128xf32>
    %c0_8 = arith.constant 0 : index
    %c0_9 = arith.constant 0 : index
    %9 = vector.load %arg5[%c0_8, %c0_9] : memref<1x128xf32, #tpu.memory_space<vmem>>, vector<1x128xf32>
    %10 = vector.broadcast %9 : vector<1x128xf32> to vector<8x128xf32>
    %11 = arith.addf %8, %10 : vector<8x128xf32>
    %c0_10 = arith.constant 0 : index
    %c0_11 = arith.constant 0 : index
    %12 = vector.load %arg6[%c0_10, %c0_11] : memref<8x128xf32, #tpu.memory_space<vmem>>, vector<8x128xf32>
    tpu.vector_store %arg6[%c0_10, %c0_11], %11 {strides = array<i32>} : memref<8x128xf32, #tpu.memory_space<vmem>>, vector<8x128xf32>,
    return
  }
  func.func @transform_0(%arg0: i32) -> (i32, i32) {
    %c0_i32 = arith.constant 0 : i32
    %c0_i32_0 = arith.constant 0 : i32
    return %arg0, %c0_i32 : i32, i32
  }
  func.func @transform_1(%arg0: i32) -> (i32, i32) {
    %c0_i32 = arith.constant 0 : i32
    %c0_i32_0 = arith.constant 0 : i32
    %c0_i32_1 = arith.constant 0 : i32
    return %c0_i32, %c0_i32_0 : i32, i32
  }
  func.func @transform_2(%arg0: i32) -> (i32, i32) {
    %c0_i32 = arith.constant 0 : i32
    %c0_i32_0 = arith.constant 0 : i32
    %c0_i32_1 = arith.constant 0 : i32
    return %c0_i32, %c0_i32_0 : i32, i32
  }
  func.func @transform_3(%arg0: i32) -> (i32, i32) {
    %c0_i32 = arith.constant 0 : i32
    %c0_i32_0 = arith.constant 0 : i32
    %c0_i32_1 = arith.constant 0 : i32
    return %c0_i32, %c0_i32_0 : i32, i32
  }
  func.func @transform_4(%arg0: i32) -> (i32, i32) {
    %c0_i32 = arith.constant 0 : i32
    %c0_i32_0 = arith.constant 0 : i32
    %c0_i32_1 = arith.constant 0 : i32
    return %c0_i32, %c0_i32_0 : i32, i32
  }
  func.func @transform_5(%arg0: i32) -> (i32, i32) {
    %c0_i32 = arith.constant 0 : i32
    %c0_i32_0 = arith.constant 0 : i32
    return %arg0, %c0_i32 : i32, i32
  }
}

</mosaic_0001>

<llo_original>
// kernel: mlp_forward.1
$region0: #{mlp_forward.1}
  #allocation0 [shape = 'u32[]', space=smem, size = 0x4, offset = 0x4, fixed_abs, tag = 'smem constant byte address 0x4 - core index']
  #allocation1 [shape = 'u32[144,128]{1,0:T(1,128)}', space=vmem, size = 0x12000, scoped, tag = 'internal scratch']
  %s0 = inlined_call_operand.vmem [shape: f32[8,128], index: 0, kind: input, shape index: {}]
  %s1 = inlined_call_operand.hbm [shape: f32[128,128], index: 1, kind: input, shape index: {}]
  %s2 = inlined_call_operand.vmem [shape: f32[1,128], index: 2, kind: input, shape index: {}]
  %s3 = inlined_call_operand.hbm [shape: f32[128,128], index: 3, kind: input, shape index: {}]
  %s4 = inlined_call_operand.vmem [shape: f32[1,128], index: 4, kind: input, shape index: {}]
  %s5 = inlined_call_operand.hbm [shape: f32[8,128], index: 5, kind: output, shape index: {}]
  %s6 = sld [smem:[#allocation0]]
  $region38: #{mlp_forward.1} parent=0
    _
  %s8 = ssub.s32 1, %s6
  %s9 = scalar_select 0, %s8, %s6
  $region1: #{mlp_forward.1} parent=0
    #allocation2 [shape = 'u8[65536]{0}', space=vmem, size = 0x10000, scoped, tag = 'input window, operand 1, single buffered']
    #allocation3 [shape = 's32[1]{0}', space=sflag, size = 0x4, scoped, tag = 'scoped memory for mlp_forward.1']
    #allocation4 [shape = 's32[1]{0}', space=sflag, size = 0x4, scoped, tag = 'scoped memory for mlp_forward.1']
    #allocation5 [shape = 'u8[65536]{0}', space=vmem, size = 0x10000, scoped, tag = 'input window, operand 3, single buffered']
    #allocation6 [shape = 's32[1]{0}', space=sflag, size = 0x4, scoped, tag = 'scoped memory for mlp_forward.1']
    #allocation7 [shape = 'u8[4096]{0}', space=vmem, size = 0x1000, scoped, tag = 'output window, operand 0, single buffered']
    %10 = vsyncpa [#allocation3], 0
    %11 = vsyncpa [#allocation6], 0
    %12 = vsyncpa [#allocation4], 0
    // Predicated region
    $region2: #{mlp_forward.1} parent=1 // pred_check
      _
    $region3: #{mlp_forward.1} parent=1 // pred_check_branch
      %14 = sbr.rel (0) target = $region5
    $region4: #{mlp_forward.1} parent=1 // pred_region
      _
    $region5: #{mlp_forward.1} parent=1 // pred_fallthru
      _
    // Predicated region
    $region6: #{mlp_forward.1} parent=1 // pred_check
      _
    $region7: #{mlp_forward.1} parent=1 // pred_check_branch
      %16 = sbr.rel (0) target = $region9
    $region8: #{mlp_forward.1} parent=1 // pred_region
      %s18 = ssub.s32 2048, 2048
      %19 = vsyncadd [#allocation3], %s18
      %s20 = sshll.u32 [#allocation2], 4
      %s21 = int_to_ptr.vmem [resolvable:$true] %s20
      %26 = dma.hbm_to_vmem [thread:$0]  %s1, 2048, %s21, [#allocation3], 128, 128, 8
    $region9: #{mlp_forward.1} parent=1 // pred_fallthru
      _
    // Predicated region
    $region10: #{mlp_forward.1} parent=1 // pred_check
      _
    $region11: #{mlp_forward.1} parent=1 // pred_check_branch
      %28 = sbr.rel (0) target = $region13
    $region12: #{mlp_forward.1} parent=1 // pred_region
      _
    $region13: #{mlp_forward.1} parent=1 // pred_fallthru
      _
    // Predicated region
    $region14: #{mlp_forward.1} parent=1 // pred_check
      _
    $region15: #{mlp_forward.1} parent=1 // pred_check_branch
      %30 = sbr.rel (0) target = $region17
    $region16: #{mlp_forward.1} parent=1 // pred_region
      %s32 = ssub.s32 2048, 2048
      %33 = vsyncadd [#allocation6], %s32
      %s34 = sshll.u32 [#allocation5], 4
      %s35 = int_to_ptr.vmem [resolvable:$true] %s34
      %40 = dma.hbm_to_vmem [thread:$0]  %s3, 2048, %s35, [#allocation6], 128, 128, 8
    $region17: #{mlp_forward.1} parent=1 // pred_fallthru
      _
    // Predicated region
    $region18: #{mlp_forward.1} parent=1 // pred_check
      _
    $region19: #{mlp_forward.1} parent=1 // pred_check_branch
      %42 = sbr.rel (0) target = $region21
    $region20: #{mlp_forward.1} parent=1 // pred_region
      _
    $region21: #{mlp_forward.1} parent=1 // pred_fallthru
      _
    // Predicated region
    $region22: #{mlp_forward.1} parent=1 // pred_check
      _
    $region23: #{mlp_forward.1} parent=1 // pred_check_branch
      %44 = sbr.rel (0) target = $region25
    $region24: #{mlp_forward.1} parent=1 // pred_region
      %45 = dma.done [#allocation3], 2048
    $region25: #{mlp_forward.1} parent=1 // pred_fallthru
      _
    // Predicated region
    $region26: #{mlp_forward.1} parent=1 // pred_check
      _
    $region27: #{mlp_forward.1} parent=1 // pred_check_branch
      %47 = sbr.rel (0) target = $region29
    $region28: #{mlp_forward.1} parent=1 // pred_region
      %48 = dma.done [#allocation6], 2048
    $region29: #{mlp_forward.1} parent=1 // pred_fallthru
      _
    %v49 = vld [vmem:[%s0] sm:$0xff]
    %v50 = vld [vmem:[#allocation2] sm:$0xff]
    %v51 = vld [vmem:[#allocation2 + $0x8] sm:$0xff]
    %v52 = vld [vmem:[#allocation2 + $0x10] sm:$0xff]
    %v53 = vld [vmem:[#allocation2 + $0x18] sm:$0xff]
    %v54 = vld [vmem:[#allocation2 + $0x20] sm:$0xff]
    %v55 = vld [vmem:[#allocation2 + $0x28] sm:$0xff]
    %v56 = vld [vmem:[#allocation2 + $0x30] sm:$0xff]
    %v57 = vld [vmem:[#allocation2 + $0x38] sm:$0xff]
    %v58 = vld [vmem:[#allocation2 + $0x40] sm:$0xff]
    %v59 = vld [vmem:[#allocation2 + $0x48] sm:$0xff]
    %v60 = vld [vmem:[#allocation2 + $0x50] sm:$0xff]
    %v61 = vld [vmem:[#allocation2 + $0x58] sm:$0xff]
    %v62 = vld [vmem:[#allocation2 + $0x60] sm:$0xff]
    %v63 = vld [vmem:[#allocation2 + $0x68] sm:$0xff]
    %v64 = vld [vmem:[#allocation2 + $0x70] sm:$0xff]
    %v65 = vld [vmem:[#allocation2 + $0x78] sm:$0xff]
    %v66 = vld [vmem:[%s2] sm:$0x1]
    %v68 = vlaneseq
    %v69 = vshrl.u32 %v68, 7
    %v70 = vsub.s32 0, %v69
    %v71 = vrot.slane %v66, %v70
    %73 = vmatprep.subr.mxu0 0.0
    %74 = vmatpush1.msra.mxu0 %v65
    %75 = vmatprep.subr.mxu0 0.0
    %76 = vmatpush1.msra.mxu0 %v64
    %77 = vmatprep.subr.mxu0 0.0
    %78 = vmatpush1.msra.mxu0 %v63
    %79 = vmatprep.subr.mxu0 0.0
    %80 = vmatpush1.msra.mxu0 %v62
    %81 = vmatprep.subr.mxu0 0.0
    %82 = vmatpush1.msra.mxu0 %v61
    %83 = vmatprep.subr.mxu0 0.0
    %84 = vmatpush1.msra.mxu0 %v60
    %85 = vmatprep.subr.mxu0 0.0
    %86 = vmatpush1.msra.mxu0 %v59
    %87 = vmatprep.subr.mxu0 0.0
    %88 = vmatpush1.msra.mxu0 %v58
    %89 = vmatprep.subr.mxu0 0.0
    %90 = vmatpush1.msra.mxu0 %v57
    %91 = vmatprep.subr.mxu0 0.0
    %92 = vmatpush1.msra.mxu0 %v56
    %93 = vmatprep.subr.mxu0 0.0
    %94 = vmatpush1.msra.mxu0 %v55
    %95 = vmatprep.subr.mxu0 0.0
    %96 = vmatpush1.msra.mxu0 %v54
    %97 = vmatprep.subr.mxu0 0.0
    %98 = vmatpush1.msra.mxu0 %v53
    %99 = vmatprep.subr.mxu0 0.0
    %100 = vmatpush1.msra.mxu0 %v52
    %101 = vmatprep.subr.mxu0 0.0
    %102 = vmatpush1.msra.mxu0 %v51
    %103 = vmatprep.subr.mxu0 0.0
    %104 = vmatpush1.msra.mxu0 %v50
    %105 = vmatprep.subr.mxu0 0.0
    %106 = vmatpush2.msra.mxu0 0.0
    %107 = vmatprep.subr.mxu0 0.0
    %108 = vmatpush2.msra.mxu0 0.0
    %109 = vmatprep.subr.mxu0 0.0
    %110 = vmatpush2.msra.mxu0 0.0
    %111 = vmatprep.subr.mxu0 0.0
    %112 = vmatpush2.msra.mxu0 0.0
    %113 = vmatprep.subr.mxu0 0.0
    %114 = vmatpush2.msra.mxu0 0.0
    %115 = vmatprep.subr.mxu0 0.0
    %116 = vmatpush2.msra.mxu0 0.0
    %117 = vmatprep.subr.mxu0 0.0
    %118 = vmatpush2.msra.mxu0 0.0
    %119 = vmatprep.subr.mxu0 0.0
    %120 = vmatpush2.msra.mxu0 0.0
    %121 = vmatprep.subr.mxu0 0.0
    %122 = vmatpush2.msra.mxu0 0.0
    %123 = vmatprep.subr.mxu0 0.0
    %124 = vmatpush2.msra.mxu0 0.0
    %125 = vmatprep.subr.mxu0 0.0
    %126 = vmatpush2.msra.mxu0 0.0
    %127 = vmatprep.subr.mxu0 0.0
    %128 = vmatpush2.msra.mxu0 0.0
    %129 = vmatprep.subr.mxu0 0.0
    %130 = vmatpush2.msra.mxu0 0.0
    %131 = vmatprep.subr.mxu0 0.0
    %132 = vmatpush2.msra.mxu0 0.0
    %133 = vmatprep.subr.mxu0 0.0
    %134 = vmatpush2.msra.mxu0 0.0
    %135 = vmatprep.subr.mxu0 0.0
    %136 = vmatpush2.msra.mxu0 0.0
    %137 = vmatprep.mubr.f32.mxu0 0.0
    %138 = vmatmul.mubr.f32.gmra.mxu0 %v49
    %v139 = vpop.f32.mrf.mxu0
    %v140 = vadd.f32 %v71, %v139
    %v141 = vpop.f32.mrf.mxu0
    %142 = vdwg.mxu0
    %v143 = vtanh.pop %v140
    %v144 = vld [vmem:[#allocation5] sm:$0xff]
    %v145 = vld [vmem:[#allocation5 + $0x8] sm:$0xff]
    %v146 = vld [vmem:[#allocation5 + $0x10] sm:$0xff]
    %v147 = vld [vmem:[#allocation5 + $0x18] sm:$0xff]
    %v148 = vld [vmem:[#allocation5 + $0x20] sm:$0xff]
    %v149 = vld [vmem:[#allocation5 + $0x28] sm:$0xff]
    %v150 = vld [vmem:[#allocation5 + $0x30] sm:$0xff]
    %v151 = vld [vmem:[#allocation5 + $0x38] sm:$0xff]
    %v152 = vld [vmem:[#allocation5 + $0x40] sm:$0xff]
    %v153 = vld [vmem:[#allocation5 + $0x48] sm:$0xff]
    %v154 = vld [vmem:[#allocation5 + $0x50] sm:$0xff]
    %v155 = vld [vmem:[#allocation5 + $0x58] sm:$0xff]
    %v156 = vld [vmem:[#allocation5 + $0x60] sm:$0xff]
    %v157 = vld [vmem:[#allocation5 + $0x68] sm:$0xff]
    %v158 = vld [vmem:[#allocation5 + $0x70] sm:$0xff]
    %v159 = vld [vmem:[#allocation5 + $0x78] sm:$0xff]
    %v160 = vld [vmem:[%s4] sm:$0x1]
    %v162 = vlaneseq
    %v163 = vshrl.u32 %v162, 7
    %v164 = vsub.s32 0, %v163
    %v165 = vrot.slane %v160, %v164
    %167 = vmatprep.subr.mxu0 0.0
    %168 = vmatpush1.msra.mxu0 %v159
    %169 = vmatprep.subr.mxu0 0.0
    %170 = vmatpush1.msra.mxu0 %v158
    %171 = vmatprep.subr.mxu0 0.0
    %172 = vmatpush1.msra.mxu0 %v157
    %173 = vmatprep.subr.mxu0 0.0
    %174 = vmatpush1.msra.mxu0 %v156
    %175 = vmatprep.subr.mxu0 0.0
    %176 = vmatpush1.msra.mxu0 %v155
    %177 = vmatprep.subr.mxu0 0.0
    %178 = vmatpush1.msra.mxu0 %v154
    %179 = vmatprep.subr.mxu0 0.0
    %180 = vmatpush1.msra.mxu0 %v153
    %181 = vmatprep.subr.mxu0 0.0
    %182 = vmatpush1.msra.mxu0 %v152
    %183 = vmatprep.subr.mxu0 0.0
    %184 = vmatpush1.msra.mxu0 %v151
    %185 = vmatprep.subr.mxu0 0.0
    %186 = vmatpush1.msra.mxu0 %v150
    %187 = vmatprep.subr.mxu0 0.0
    %188 = vmatpush1.msra.mxu0 %v149
    %189 = vmatprep.subr.mxu0 0.0
    %190 = vmatpush1.msra.mxu0 %v148
    %191 = vmatprep.subr.mxu0 0.0
    %192 = vmatpush1.msra.mxu0 %v147
    %193 = vmatprep.subr.mxu0 0.0
    %194 = vmatpush1.msra.mxu0 %v146
    %195 = vmatprep.subr.mxu0 0.0
    %196 = vmatpush1.msra.mxu0 %v145
    %197 = vmatprep.subr.mxu0 0.0
    %198 = vmatpush1.msra.mxu0 %v144
    %199 = vmatprep.subr.mxu0 0.0
    %200 = vmatpush2.msra.mxu0 0.0
    %201 = vmatprep.subr.mxu0 0.0
    %202 = vmatpush2.msra.mxu0 0.0
    %203 = vmatprep.subr.mxu0 0.0
    %204 = vmatpush2.msra.mxu0 0.0
    %205 = vmatprep.subr.mxu0 0.0
    %206 = vmatpush2.msra.mxu0 0.0
    %207 = vmatprep.subr.mxu0 0.0
    %208 = vmatpush2.msra.mxu0 0.0
    %209 = vmatprep.subr.mxu0 0.0
    %210 = vmatpush2.msra.mxu0 0.0
    %211 = vmatprep.subr.mxu0 0.0
    %212 = vmatpush2.msra.mxu0 0.0
    %213 = vmatprep.subr.mxu0 0.0
    %214 = vmatpush2.msra.mxu0 0.0
    %215 = vmatprep.subr.mxu0 0.0
    %216 = vmatpush2.msra.mxu0 0.0
    %217 = vmatprep.subr.mxu0 0.0
    %218 = vmatpush2.msra.mxu0 0.0
    %219 = vmatprep.subr.mxu0 0.0
    %220 = vmatpush2.msra.mxu0 0.0
    %221 = vmatprep.subr.mxu0 0.0
    %222 = vmatpush2.msra.mxu0 0.0
    %223 = vmatprep.subr.mxu0 0.0
    %224 = vmatpush2.msra.mxu0 0.0
    %225 = vmatprep.subr.mxu0 0.0
    %226 = vmatpush2.msra.mxu0 0.0
    %227 = vmatprep.subr.mxu0 0.0
    %228 = vmatpush2.msra.mxu0 0.0
    %229 = vmatprep.subr.mxu0 0.0
    %230 = vmatpush2.msra.mxu0 0.0
    %231 = vmatprep.mubr.f32.mxu0 0.0
    %232 = vmatmul.mubr.f32.gmra.mxu0 %v143
    %v233 = vpop.f32.mrf.mxu0
    %v234 = vadd.f32 %v165, %v233
    %v235 = vpop.f32.mrf.mxu0
    %236 = vdwg.mxu0
    %237 = vst [vmem:[#allocation7] sm:$0xff] %v234
    // Predicated region
    $region30: #{mlp_forward.1} parent=1 // pred_check
      _
    $region31: #{mlp_forward.1} parent=1 // pred_check_branch
      %239 = sbr.rel (0) target = $region33
    $region32: #{mlp_forward.1} parent=1 // pred_region
      %s241 = ssub.s32 128, 128
      %242 = vsyncadd [#allocation4], %s241
      %s244 = sshll.u32 [#allocation7], 4
      %s245 = int_to_ptr.vmem [resolvable:$true] %s244
      %247 = dma.vmem_to_hbm [thread:$0]  %s245, 128, %s5, [#allocation4]
    $region33: #{mlp_forward.1} parent=1 // pred_fallthru
      _
    // Predicated region
    $region34: #{mlp_forward.1} parent=1 // pred_check
      _
    $region35: #{mlp_forward.1} parent=1 // pred_check_branch
      %249 = sbr.rel (0) target = $region37
    $region36: #{mlp_forward.1} parent=1 // pred_region
      %250 = dma.done [#allocation4], 128
    $region37: #{mlp_forward.1} parent=1 // pred_fallthru
      _
    %251 = vsyncpa [#allocation3], 1
    %252 = vsyncpa [#allocation6], 1
    %253 = vsyncpa [#allocation4], 1

</llo_original>
